<compile_context>
chip_gen: v6e
topology: v6e:2x2x1
jax: 0.10.0
libtpu: 0.0.40
codegen_flags: <defaults>
</compile_context>

<pallas_src>
import jax
import jax.numpy as jnp
from jax.experimental import pallas as pl
from jax.experimental.pallas import tpu as pltpu


def _dqn_mlp_kernel(x_ref, w1_ref, b1_ref, w2_ref, b2_ref, w3_ref, b3_ref, o_ref):
    # x_ref: (9, TB) feature-major block.  Weights in torch (out, in) layout,
    # biases as (out, 1) columns broadcasting along the lane (batch) axis.
    x = x_ref[...]
    # Layer 1: (32,9) @ (9,TB) -> (32,TB), ReLU
    h1 = jnp.dot(w1_ref[...], x, preferred_element_type=jnp.float32)
    h1 = jnp.maximum(h1 + b1_ref[...], 0.0)
    # Layer 2: (32,32) @ (32,TB) -> (32,TB), ReLU
    h2 = jnp.dot(w2_ref[...], h1, preferred_element_type=jnp.float32)
    h2 = jnp.maximum(h2 + b2_ref[...], 0.0)
    # Layer 3: (9,32) @ (32,TB) -> (9,TB)
    out = jnp.dot(w3_ref[...], h2, preferred_element_type=jnp.float32)
    o_ref[...] = (out + b3_ref[...]).astype(o_ref.dtype)


def dqn_forward(x, params, *, block_b=512):
    """x: (B, 9) float32 board states.  Returns (B, 9) Q-values.

    params: torch-layout weights {"w1":(32,9), "b1":(32,1), "w2":(32,32),
    "b2":(32,1), "w3":(9,32), "b3":(9,1)}.
    """
    w1, b1, w2, b2, w3, b3 = (
        params["w1"], params["b1"], params["w2"],
        params["b2"], params["w3"], params["b3"],
    )
    B = x.shape[0]

    # Lane-aligned batch tile: multiple of 128, capped at block_b.
    tile = min(block_b, pl.cdiv(B, 128) * 128)
    b_padded = pl.cdiv(B, tile) * tile

    # Layout plumbing in the wrapper (not in-kernel): feature-major input.
    xt = x.T  # (9, B)
    if b_padded != B:
        xt = jnp.pad(xt, ((0, 0), (0, b_padded - B)))

    grid = (b_padded // tile,)
    const = lambda shape: pl.BlockSpec(shape, lambda i: (0, 0))

    out_t = pl.pallas_call(
        _dqn_mlp_kernel,
        out_shape=jax.ShapeDtypeStruct((9, b_padded), jnp.float32),
        grid=grid,
        in_specs=[
            pl.BlockSpec((9, tile), lambda i: (0, i)),   # x tile (batch on lanes)
            const((32, 9)),  const((32, 1)),             # layer 1
            const((32, 32)), const((32, 1)),             # layer 2
            const((9, 32)),  const((9, 1)),              # layer 3
        ],
        out_specs=pl.BlockSpec((9, tile), lambda i: (0, i)),
        compiler_params=pltpu.CompilerParams(
            dimension_semantics=("parallel",),           # megacore-shardable on v7x
        ),
    )(xt, w1, b1, w2, b2, w3, b3)

    return out_t[:, :B].T  # back to (B, 9)


def init_params(key):
    """Deterministic init mimicking nn.Linear default (uniform +/- 1/sqrt(fan_in)).
    Weights kept in torch (out_features, in_features) layout; biases as (out, 1)."""
    ks = jax.random.split(key, 6)

    def linear(kw, kb, fan_in, fan_out):
        bound = 1.0 / jnp.sqrt(fan_in)
        w = jax.random.uniform(kw, (fan_out, fan_in), jnp.float32, -bound, bound)
        b = jax.random.uniform(kb, (fan_out, 1), jnp.float32, -bound, bound)
        return w, b

    w1, b1 = linear(ks[0], ks[1], 9, 32)
    w2, b2 = linear(ks[2], ks[3], 32, 32)
    w3, b3 = linear(ks[4], ks[5], 32, 9)
    return {"w1": w1, "b1": b1, "w2": w2, "b2": b2, "w3": w3, "b3": b3}


def _reference(x, p):
    h1 = jnp.maximum(x @ p["w1"].T + p["b1"].T, 0.0)
    h2 = jnp.maximum(h1 @ p["w2"].T + p["b2"].T, 0.0)
    return h2 @ p["w3"].T + p["b3"].T


if __name__ == "__main__":
    key = jax.random.PRNGKey(0)
    k_param, k_x1, k_x2 = jax.random.split(key, 3)
    params = init_params(k_param)

    # Small, module-consistent shapes: board state is 9 cells.
    batch = 8
    x = jax.random.normal(k_x1, (batch, 9), jnp.float32)
    out = jax.block_until_ready(dqn_forward(x, params))
    ref = _reference(x, params)
    assert out.shape == (batch, 9)
    assert jnp.allclose(out, ref, atol=1e-5, rtol=1e-5), "mismatch vs reference (B=8)"

    # Exercise multi-step grid + padding path (non-multiple-of-tile batch).
    batch2 = 600
    x2 = jax.random.normal(k_x2, (batch2, 9), jnp.float32)
    out2 = jax.block_until_ready(dqn_forward(x2, params))
    ref2 = _reference(x2, params)
    assert out2.shape == (batch2, 9)
    assert jnp.allclose(out2, ref2, atol=1e-5, rtol=1e-5), "mismatch vs reference (B=600)"

    print("KERNEL_OK")
</pallas_src>

<mosaic_0001>
module attributes {stable_mosaic.version = 11 : i64} {
  func.func @_dqn_mlp_kernel(%arg0: i32, %arg1: memref<9x128xf32, #tpu.memory_space<vmem>>, %arg2: memref<32x9xf32, #tpu.memory_space<vmem>>, %arg3: memref<32x1xf32, #tpu.memory_space<vmem>>, %arg4: memref<32x32xf32, #tpu.memory_space<vmem>>, %arg5: memref<32x1xf32, #tpu.memory_space<vmem>>, %arg6: memref<9x32xf32, #tpu.memory_space<vmem>>, %arg7: memref<9x1xf32, #tpu.memory_space<vmem>>, %arg8: memref<9x128xf32, #tpu.memory_space<vmem>>) attributes {dimension_semantics = [#tpu.dimension_semantics<parallel>], iteration_bounds = array<i64: 1>, scalar_prefetch = 0 : i64, scratch_operands = 0 : i64, tpu.core_type = #tpu.core_type<tc>, window_params = [{transform_indices = @transform_0, window_bounds = array<i64: 9, 128>}, {pipeline_mode = #tpu.pipeline_mode<synchronous>, transform_indices = @transform_1, window_bounds = array<i64: 32, 9>}, {pipeline_mode = #tpu.pipeline_mode<synchronous>, transform_indices = @transform_2, window_bounds = array<i64: 32, 1>}, {pipeline_mode = #tpu.pipeline_mode<synchronous>, transform_indices = @transform_3, window_bounds = array<i64: 32, 32>}, {pipeline_mode = #tpu.pipeline_mode<synchronous>, transform_indices = @transform_4, window_bounds = array<i64: 32, 1>}, {pipeline_mode = #tpu.pipeline_mode<synchronous>, transform_indices = @transform_5, window_bounds = array<i64: 9, 32>}, {pipeline_mode = #tpu.pipeline_mode<synchronous>, transform_indices = @transform_6, window_bounds = array<i64: 9, 1>}, {transform_indices = @transform_7, window_bounds = array<i64: 9, 128>}]} {
    %c0 = arith.constant 0 : index
    %c0_0 = arith.constant 0 : index
    %0 = vector.load %arg1[%c0, %c0_0] : memref<9x128xf32, #tpu.memory_space<vmem>>, vector<9x128xf32>
    %c0_1 = arith.constant 0 : index
    %c0_2 = arith.constant 0 : index
    %1 = vector.load %arg2[%c0_1, %c0_2] : memref<32x9xf32, #tpu.memory_space<vmem>>, vector<32x9xf32>
    %cst = arith.constant dense<0.000000e+00> : vector<32x128xf32>
    %2 = tpu.matmul %1, %0, %cst {dimension_numbers = #tpu.dot_dimension_numbers<[1], [0], [0], [1], [0, 0, 1, 1], [], []>} : vector<32x9xf32>, vector<9x128xf32>, vector<32x128xf32> -> vector<32x128xf32>
    %c0_3 = arith.constant 0 : index
    %c0_4 = arith.constant 0 : index
    %3 = vector.load %arg3[%c0_3, %c0_4] : memref<32x1xf32, #tpu.memory_space<vmem>>, vector<32x1xf32>
    %4 = vector.broadcast %3 : vector<32x1xf32> to vector<32x128xf32>
    %5 = arith.addf %2, %4 : vector<32x128xf32>
    %cst_5 = arith.constant 0.000000e+00 : f32
    %6 = vector.broadcast %cst_5 : f32 to vector<32x128xf32>
    %7 = arith.maximumf %5, %6 : vector<32x128xf32>
    %c0_6 = arith.constant 0 : index
    %c0_7 = arith.constant 0 : index
    %8 = vector.load %arg4[%c0_6, %c0_7] : memref<32x32xf32, #tpu.memory_space<vmem>>, vector<32x32xf32>
    %cst_8 = arith.constant dense<0.000000e+00> : vector<32x128xf32>
    %9 = tpu.matmul %8, %7, %cst_8 {dimension_numbers = #tpu.dot_dimension_numbers<[1], [0], [0], [1], [0, 0, 1, 1], [], []>} : vector<32x32xf32>, vector<32x128xf32>, vector<32x128xf32> -> vector<32x128xf32>
    %c0_9 = arith.constant 0 : index
    %c0_10 = arith.constant 0 : index
    %10 = vector.load %arg5[%c0_9, %c0_10] : memref<32x1xf32, #tpu.memory_space<vmem>>, vector<32x1xf32>
    %11 = vector.broadcast %10 : vector<32x1xf32> to vector<32x128xf32>
    %12 = arith.addf %9, %11 : vector<32x128xf32>
    %cst_11 = arith.constant 0.000000e+00 : f32
    %13 = vector.broadcast %cst_11 : f32 to vector<32x128xf32>
    %14 = arith.maximumf %12, %13 : vector<32x128xf32>
    %c0_12 = arith.constant 0 : index
    %c0_13 = arith.constant 0 : index
    %15 = vector.load %arg6[%c0_12, %c0_13] : memref<9x32xf32, #tpu.memory_space<vmem>>, vector<9x32xf32>
    %cst_14 = arith.constant dense<0.000000e+00> : vector<9x128xf32>
    %16 = tpu.matmul %15, %14, %cst_14 {dimension_numbers = #tpu.dot_dimension_numbers<[1], [0], [0], [1], [0, 0, 1, 1], [], []>} : vector<9x32xf32>, vector<32x128xf32>, vector<9x128xf32> -> vector<9x128xf32>
    %c0_15 = arith.constant 0 : index
    %c0_16 = arith.constant 0 : index
    %17 = vector.load %arg7[%c0_15, %c0_16] : memref<9x1xf32, #tpu.memory_space<vmem>>, vector<9x1xf32>
    %18 = vector.broadcast %17 : vector<9x1xf32> to vector<9x128xf32>
    %19 = arith.addf %16, %18 : vector<9x128xf32>
    %c0_17 = arith.constant 0 : index
    %c0_18 = arith.constant 0 : index
    %20 = vector.load %arg8[%c0_17, %c0_18] : memref<9x128xf32, #tpu.memory_space<vmem>>, vector<9x128xf32>
    tpu.vector_store %arg8[%c0_17, %c0_18], %19 {strides = array<i32>} : memref<9x128xf32, #tpu.memory_space<vmem>>, vector<9x128xf32>,
    return
  }
  func.func @transform_0(%arg0: i32) -> (i32, i32) {
    %c0_i32 = arith.constant 0 : i32
    %c0_i32_0 = arith.constant 0 : i32
    return %c0_i32, %arg0 : i32, i32
  }
  func.func @transform_1(%arg0: i32) -> (i32, i32) {
    %c0_i32 = arith.constant 0 : i32
    %c0_i32_0 = arith.constant 0 : i32
    %c0_i32_1 = arith.constant 0 : i32
    return %c0_i32, %c0_i32_0 : i32, i32
  }
  func.func @transform_2(%arg0: i32) -> (i32, i32) {
    %c0_i32 = arith.constant 0 : i32
    %c0_i32_0 = arith.constant 0 : i32
    %c0_i32_1 = arith.constant 0 : i32
    return %c0_i32, %c0_i32_0 : i32, i32
  }
  func.func @transform_3(%arg0: i32) -> (i32, i32) {
    %c0_i32 = arith.constant 0 : i32
    %c0_i32_0 = arith.constant 0 : i32
    %c0_i32_1 = arith.constant 0 : i32
    return %c0_i32, %c0_i32_0 : i32, i32
  }
  func.func @transform_4(%arg0: i32) -> (i32, i32) {
    %c0_i32 = arith.constant 0 : i32
    %c0_i32_0 = arith.constant 0 : i32
    %c0_i32_1 = arith.constant 0 : i32
    return %c0_i32, %c0_i32_0 : i32, i32
  }
  func.func @transform_5(%arg0: i32) -> (i32, i32) {
    %c0_i32 = arith.constant 0 : i32
    %c0_i32_0 = arith.constant 0 : i32
    %c0_i32_1 = arith.constant 0 : i32
    return %c0_i32, %c0_i32_0 : i32, i32
  }
  func.func @transform_6(%arg0: i32) -> (i32, i32) {
    %c0_i32 = arith.constant 0 : i32
    %c0_i32_0 = arith.constant 0 : i32
    %c0_i32_1 = arith.constant 0 : i32
    return %c0_i32, %c0_i32_0 : i32, i32
  }
  func.func @transform_7(%arg0: i32) -> (i32, i32) {
    %c0_i32 = arith.constant 0 : i32
    %c0_i32_0 = arith.constant 0 : i32
    return %c0_i32, %arg0 : i32, i32
  }
}

</mosaic_0001>

<llo_original>
// kernel: tpu_custom_call.1
$region0: #{tpu_custom_call.1}
  #allocation0 [shape = 'u32[]', space=smem, size = 0x4, offset = 0x4, fixed_abs, tag = 'smem constant byte address 0x4 - core index']
  #allocation1 [shape = 'u32[144,128]{1,0:T(1,128)}', space=vmem, size = 0x12000, scoped, tag = 'internal scratch']
  %s0 = inlined_call_operand.vmem [shape: f32[9,128], index: 0, kind: input, shape index: {}]
  %s1 = inlined_call_operand.vmem [shape: f32[32,9], index: 1, kind: input, shape index: {}]
  %s2 = inlined_call_operand.vmem [shape: f32[32,1], index: 2, kind: input, shape index: {}]
  %s3 = inlined_call_operand.vmem [shape: f32[32,32], index: 3, kind: input, shape index: {}]
  %s4 = inlined_call_operand.vmem [shape: f32[32,1], index: 4, kind: input, shape index: {}]
  %s5 = inlined_call_operand.vmem [shape: f32[9,32], index: 5, kind: input, shape index: {}]
  %s6 = inlined_call_operand.vmem [shape: f32[9,1], index: 6, kind: input, shape index: {}]
  %s7 = inlined_call_operand.hbm [shape: f32[9,128], index: 7, kind: output, shape index: {}]
  %s8 = sld [smem:[#allocation0]]
  $region38: #{tpu_custom_call.1} parent=0
    _
  %s10 = ssub.s32 1, %s8
  %s11 = scalar_select 0, %s10, %s8
  $region1: #{tpu_custom_call.1} parent=0
    #allocation2 [shape = 'u8[8192]{0}', space=vmem, size = 0x2000, scoped, tag = 'output window, operand 0, single buffered']
    #allocation3 [shape = 's32[1]{0}', space=sflag, size = 0x4, scoped, tag = 'scoped memory for tpu_custom_call.1']
    %12 = vsyncpa [#allocation3], 0
    // Predicated region
    $region2: #{tpu_custom_call.1} parent=1 // pred_check
      _
    $region3: #{tpu_custom_call.1} parent=1 // pred_check_branch
      %14 = sbr.rel (0) target = $region5
    $region4: #{tpu_custom_call.1} parent=1 // pred_region
      _
    $region5: #{tpu_custom_call.1} parent=1 // pred_fallthru
      _
    // Predicated region
    $region6: #{tpu_custom_call.1} parent=1 // pred_check
      _
    $region7: #{tpu_custom_call.1} parent=1 // pred_check_branch
      %16 = sbr.rel (0) target = $region9
    $region8: #{tpu_custom_call.1} parent=1 // pred_region
      _
    $region9: #{tpu_custom_call.1} parent=1 // pred_fallthru
      _
    // Predicated region
    $region10: #{tpu_custom_call.1} parent=1 // pred_check
      _
    $region11: #{tpu_custom_call.1} parent=1 // pred_check_branch
      %18 = sbr.rel (0) target = $region13
    $region12: #{tpu_custom_call.1} parent=1 // pred_region
      _
    $region13: #{tpu_custom_call.1} parent=1 // pred_fallthru
      _
    // Predicated region
    $region14: #{tpu_custom_call.1} parent=1 // pred_check
      _
    $region15: #{tpu_custom_call.1} parent=1 // pred_check_branch
      %20 = sbr.rel (0) target = $region17
    $region16: #{tpu_custom_call.1} parent=1 // pred_region
      _
    $region17: #{tpu_custom_call.1} parent=1 // pred_fallthru
      _
    // Predicated region
    $region18: #{tpu_custom_call.1} parent=1 // pred_check
      _
    $region19: #{tpu_custom_call.1} parent=1 // pred_check_branch
      %22 = sbr.rel (0) target = $region21
    $region20: #{tpu_custom_call.1} parent=1 // pred_region
      _
    $region21: #{tpu_custom_call.1} parent=1 // pred_fallthru
      _
    // Predicated region
    $region22: #{tpu_custom_call.1} parent=1 // pred_check
      _
    $region23: #{tpu_custom_call.1} parent=1 // pred_check_branch
      %24 = sbr.rel (0) target = $region25
    $region24: #{tpu_custom_call.1} parent=1 // pred_region
      _
    $region25: #{tpu_custom_call.1} parent=1 // pred_fallthru
      _
    // Predicated region
    $region26: #{tpu_custom_call.1} parent=1 // pred_check
      _
    $region27: #{tpu_custom_call.1} parent=1 // pred_check_branch
      %26 = sbr.rel (0) target = $region29
    $region28: #{tpu_custom_call.1} parent=1 // pred_region
      _
    $region29: #{tpu_custom_call.1} parent=1 // pred_fallthru
      _
    %v27 = vld [vmem:[%s0] sm:$0xff]
    %v28 = vld [vmem:[%s0 + $0x8] sm:$0x1]
    %v29 = vld [vmem:[%s1] sm:$0xff]
    %v30 = vld [vmem:[%s1 + $0x8] sm:$0xff]
    %v31 = vld [vmem:[%s1 + $0x10] sm:$0xff]
    %v32 = vld [vmem:[%s1 + $0x18] sm:$0xff]
    %v33 = vld [vmem:[%s2] sm:$0xff]
    %v34 = vld [vmem:[%s2 + $0x8] sm:$0xff]
    %v35 = vld [vmem:[%s2 + $0x10] sm:$0xff]
    %v36 = vld [vmem:[%s2 + $0x18] sm:$0xff]
    %38 = vset.pattern.permute.xlu0 0
    %39 = vperm.xlu0 %38, %v33
    %v40 = vpop.permute.xlu0 %39
    %43 = vset.pattern.permute.xlu0 0
    %44 = vperm.xlu0 %43, %v34
    %v45 = vpop.permute.xlu0 %44
    %48 = vset.pattern.permute.xlu0 0
    %49 = vperm.xlu0 %48, %v35
    %v50 = vpop.permute.xlu0 %49
    %53 = vset.pattern.permute.xlu0 0
    %54 = vperm.xlu0 %53, %v36
    %v55 = vpop.permute.xlu0 %54
    %vm57 = vcmask 72704
    %v59 = vsel %vm57, %v29, 0
    %v62 = vsel %vm57, %v30, 0
    %v65 = vsel %vm57, %v31, 0
    %v68 = vsel %vm57, %v32, 0
    %vm70 = vcmask 1040384
    %v72 = vsel %vm70, %v28, 0
    %74 = vmatprep.subr.mxu0 0.0
    %75 = vmatpush1.msra.mxu0 0.0
    %76 = vmatprep.subr.mxu0 0.0
    %77 = vmatpush1.msra.mxu0 0.0
    %78 = vmatprep.subr.mxu0 0.0
    %79 = vmatpush1.msra.mxu0 0.0
    %80 = vmatprep.subr.mxu0 0.0
    %81 = vmatpush1.msra.mxu0 0.0
    %82 = vmatprep.subr.mxu0 0.0
    %83 = vmatpush1.msra.mxu0 0.0
    %84 = vmatprep.subr.mxu0 0.0
    %85 = vmatpush1.msra.mxu0 0.0
    %86 = vmatprep.subr.mxu0 0.0
    %87 = vmatpush1.msra.mxu0 0.0
    %88 = vmatprep.subr.mxu0 0.0
    %89 = vmatpush1.msra.mxu0 0.0
    %90 = vmatprep.subr.mxu0 0.0
    %91 = vmatpush1.msra.mxu0 0.0
    %92 = vmatprep.subr.mxu0 0.0
    %93 = vmatpush1.msra.mxu0 0.0
    %94 = vmatprep.subr.mxu0 0.0
    %95 = vmatpush1.msra.mxu0 0.0
    %96 = vmatprep.subr.mxu0 0.0
    %97 = vmatpush1.msra.mxu0 0.0
    %98 = vmatprep.subr.mxu0 0.0
    %99 = vmatpush1.msra.mxu0 0.0
    %100 = vmatprep.subr.mxu0 0.0
    %101 = vmatpush1.msra.mxu0 0.0
    %102 = vmatprep.subr.mxu0 0.0
    %103 = vmatpush1.msra.mxu0 %v72
    %104 = vmatprep.subr.mxu0 0.0
    %105 = vmatpush1.msra.mxu0 %v27
    %106 = vmatprep.subr.mxu0 0.0
    %107 = vmatpush2.msra.mxu0 0.0
    %108 = vmatprep.subr.mxu0 0.0
    %109 = vmatpush2.msra.mxu0 0.0
    %110 = vmatprep.subr.mxu0 0.0
    %111 = vmatpush2.msra.mxu0 0.0
    %112 = vmatprep.subr.mxu0 0.0
    %113 = vmatpush2.msra.mxu0 0.0
    %114 = vmatprep.subr.mxu0 0.0
    %115 = vmatpush2.msra.mxu0 0.0
    %116 = vmatprep.subr.mxu0 0.0
    %117 = vmatpush2.msra.mxu0 0.0
    %118 = vmatprep.subr.mxu0 0.0
    %119 = vmatpush2.msra.mxu0 0.0
    %120 = vmatprep.subr.mxu0 0.0
    %121 = vmatpush2.msra.mxu0 0.0
    %122 = vmatprep.subr.mxu0 0.0
    %123 = vmatpush2.msra.mxu0 0.0
    %124 = vmatprep.subr.mxu0 0.0
    %125 = vmatpush2.msra.mxu0 0.0
    %126 = vmatprep.subr.mxu0 0.0
    %127 = vmatpush2.msra.mxu0 0.0
    %128 = vmatprep.subr.mxu0 0.0
    %129 = vmatpush2.msra.mxu0 0.0
    %130 = vmatprep.subr.mxu0 0.0
    %131 = vmatpush2.msra.mxu0 0.0
    %132 = vmatprep.subr.mxu0 0.0
    %133 = vmatpush2.msra.mxu0 0.0
    %134 = vmatprep.subr.mxu0 0.0
    %135 = vmatpush2.msra.mxu0 0.0
    %136 = vmatprep.subr.mxu0 0.0
    %137 = vmatpush2.msra.mxu0 0.0
    %138 = vmatprep.mubr.f32.mxu0 0.0
    %139 = vmatmul.mubr.f32.gmra.mxu0 %v59
    %v140 = vpop.f32.mrf.mxu0
    %v141 = vadd.f32 %v40, %v140
    %v142 = vpop.f32.mrf.mxu0
    %143 = vmatprep.mubr.f32.mxu0 0.0
    %144 = vmatmul.mubr.f32.gmra.mxu0 %v62
    %v145 = vpop.f32.mrf.mxu0
    %v146 = vadd.f32 %v45, %v145
    %v147 = vpop.f32.mrf.mxu0
    %148 = vmatprep.mubr.f32.mxu0 0.0
    %149 = vmatmul.mubr.f32.gmra.mxu0 %v65
    %v150 = vpop.f32.mrf.mxu0
    %v151 = vadd.f32 %v50, %v150
    %v152 = vpop.f32.mrf.mxu0
    %153 = vmatprep.mubr.f32.mxu0 0.0
    %154 = vmatmul.mubr.f32.gmra.mxu0 %v68
    %v155 = vpop.f32.mrf.mxu0
    %v156 = vadd.f32 %v55, %v155
    %v157 = vpop.f32.mrf.mxu0
    %158 = vdwg.mxu0
    %v159 = vmax.f32 %v141, 0.0
    %v160 = vmax.f32 %v146, 0.0
    %v161 = vmax.f32 %v151, 0.0
    %v162 = vmax.f32 %v156, 0.0
    %v163 = vld [vmem:[%s3] sm:$0xff]
    %v164 = vld [vmem:[%s3 + $0x8] sm:$0xff]
    %v165 = vld [vmem:[%s3 + $0x10] sm:$0xff]
    %v166 = vld [vmem:[%s3 + $0x18] sm:$0xff]
    %v167 = vld [vmem:[%s4] sm:$0xff]
    %v168 = vld [vmem:[%s4 + $0x8] sm:$0xff]
    %v169 = vld [vmem:[%s4 + $0x10] sm:$0xff]
    %v170 = vld [vmem:[%s4 + $0x18] sm:$0xff]
    %172 = vset.pattern.permute.xlu0 0
    %173 = vperm.xlu0 %172, %v167
    %v174 = vpop.permute.xlu0 %173
    %177 = vset.pattern.permute.xlu0 0
    %178 = vperm.xlu0 %177, %v168
    %v179 = vpop.permute.xlu0 %178
    %182 = vset.pattern.permute.xlu0 0
    %183 = vperm.xlu0 %182, %v169
    %v184 = vpop.permute.xlu0 %183
    %187 = vset.pattern.permute.xlu0 0
    %188 = vperm.xlu0 %187, %v170
    %v189 = vpop.permute.xlu0 %188
    %vm191 = vcmask 261120
    %v193 = vsel %vm191, %v163, 0
    %v196 = vsel %vm191, %v164, 0
    %v199 = vsel %vm191, %v165, 0
    %v202 = vsel %vm191, %v166, 0
    %204 = vmatprep.subr.mxu0 0.0
    %205 = vmatpush1.msra.mxu0 0.0
    %206 = vmatprep.subr.mxu0 0.0
    %207 = vmatpush1.msra.mxu0 0.0
    %208 = vmatprep.subr.mxu0 0.0
    %209 = vmatpush1.msra.mxu0 0.0
    %210 = vmatprep.subr.mxu0 0.0
    %211 = vmatpush1.msra.mxu0 0.0
    %212 = vmatprep.subr.mxu0 0.0
    %213 = vmatpush1.msra.mxu0 0.0
    %214 = vmatprep.subr.mxu0 0.0
    %215 = vmatpush1.msra.mxu0 0.0
    %216 = vmatprep.subr.mxu0 0.0
    %217 = vmatpush1.msra.mxu0 0.0
    %218 = vmatprep.subr.mxu0 0.0
    %219 = vmatpush1.msra.mxu0 0.0
    %220 = vmatprep.subr.mxu0 0.0
    %221 = vmatpush1.msra.mxu0 0.0
    %222 = vmatprep.subr.mxu0 0.0
    %223 = vmatpush1.msra.mxu0 0.0
    %224 = vmatprep.subr.mxu0 0.0
    %225 = vmatpush1.msra.mxu0 0.0
    %226 = vmatprep.subr.mxu0 0.0
    %227 = vmatpush1.msra.mxu0 0.0
    %228 = vmatprep.subr.mxu0 0.0
    %229 = vmatpush1.msra.mxu0 %v162
    %230 = vmatprep.subr.mxu0 0.0
    %231 = vmatpush1.msra.mxu0 %v161
    %232 = vmatprep.subr.mxu0 0.0
    %233 = vmatpush1.msra.mxu0 %v160
    %234 = vmatprep.subr.mxu0 0.0
    %235 = vmatpush1.msra.mxu0 %v159
    %236 = vmatprep.subr.mxu0 0.0
    %237 = vmatpush2.msra.mxu0 0.0
    %238 = vmatprep.subr.mxu0 0.0
    %239 = vmatpush2.msra.mxu0 0.0
    %240 = vmatprep.subr.mxu0 0.0
    %241 = vmatpush2.msra.mxu0 0.0
    %242 = vmatprep.subr.mxu0 0.0
    %243 = vmatpush2.msra.mxu0 0.0
    %244 = vmatprep.subr.mxu0 0.0
    %245 = vmatpush2.msra.mxu0 0.0
    %246 = vmatprep.subr.mxu0 0.0
    %247 = vmatpush2.msra.mxu0 0.0
    %248 = vmatprep.subr.mxu0 0.0
    %249 = vmatpush2.msra.mxu0 0.0
    %250 = vmatprep.subr.mxu0 0.0
    %251 = vmatpush2.msra.mxu0 0.0
    %252 = vmatprep.subr.mxu0 0.0
    %253 = vmatpush2.msra.mxu0 0.0
    %254 = vmatprep.subr.mxu0 0.0
    %255 = vmatpush2.msra.mxu0 0.0
    %256 = vmatprep.subr.mxu0 0.0
    %257 = vmatpush2.msra.mxu0 0.0
    %258 = vmatprep.subr.mxu0 0.0
    %259 = vmatpush2.msra.mxu0 0.0
    %260 = vmatprep.subr.mxu0 0.0
    %261 = vmatpush2.msra.mxu0 0.0
    %262 = vmatprep.subr.mxu0 0.0
    %263 = vmatpush2.msra.mxu0 0.0
    %264 = vmatprep.subr.mxu0 0.0
    %265 = vmatpush2.msra.mxu0 0.0
    %266 = vmatprep.subr.mxu0 0.0
    %267 = vmatpush2.msra.mxu0 0.0
    %268 = vmatprep.mubr.f32.mxu0 0.0
    %269 = vmatmul.mubr.f32.gmra.mxu0 %v193
    %v270 = vpop.f32.mrf.mxu0
    %v271 = vadd.f32 %v174, %v270
    %v272 = vpop.f32.mrf.mxu0
    %273 = vmatprep.mubr.f32.mxu0 0.0
    %274 = vmatmul.mubr.f32.gmra.mxu0 %v196
    %v275 = vpop.f32.mrf.mxu0
    %v276 = vadd.f32 %v179, %v275
    %v277 = vpop.f32.mrf.mxu0
    %278 = vmatprep.mubr.f32.mxu0 0.0
    %279 = vmatmul.mubr.f32.gmra.mxu0 %v199
    %v280 = vpop.f32.mrf.mxu0
    %v281 = vadd.f32 %v184, %v280
    %v282 = vpop.f32.mrf.mxu0
    %283 = vmatprep.mubr.f32.mxu0 0.0
    %284 = vmatmul.mubr.f32.gmra.mxu0 %v202
    %v285 = vpop.f32.mrf.mxu0
    %v286 = vadd.f32 %v189, %v285
    %v287 = vpop.f32.mrf.mxu0
    %288 = vdwg.mxu0
    %v289 = vmax.f32 %v271, 0.0
    %v290 = vmax.f32 %v276, 0.0
    %v291 = vmax.f32 %v281, 0.0
    %v292 = vmax.f32 %v286, 0.0
    %v293 = vld [vmem:[%s5] sm:$0xff]
    %v294 = vld [vmem:[%s5 + $0x8] sm:$0x1]
    %v295 = vld [vmem:[%s6] sm:$0xff]
    %v296 = vld [vmem:[%s6 + $0x8] sm:$0x1]
    %298 = vset.pattern.permute.xlu0 0
    %299 = vperm.xlu0 %298, %v295
    %v300 = vpop.permute.xlu0 %299
    %303 = vset.pattern.permute.xlu0 0
    %304 = vperm.xlu0 %303, %v296
    %v305 = vpop.permute.xlu0 %304
    %v308 = vsel %vm191, %v293, 0
    %v311 = vsel %vm191, %v294, 0
    %313 = vmatprep.subr.mxu0 0.0
    %314 = vmatpush1.msra.mxu0 0.0
    %315 = vmatprep.subr.mxu0 0.0
    %316 = vmatpush1.msra.mxu0 0.0
    %317 = vmatprep.subr.mxu0 0.0
    %318 = vmatpush1.msra.mxu0 0.0
    %319 = vmatprep.subr.mxu0 0.0
    %320 = vmatpush1.msra.mxu0 0.0
    %321 = vmatprep.subr.mxu0 0.0
    %322 = vmatpush1.msra.mxu0 0.0
    %323 = vmatprep.subr.mxu0 0.0
    %324 = vmatpush1.msra.mxu0 0.0
    %325 = vmatprep.subr.mxu0 0.0
    %326 = vmatpush1.msra.mxu0 0.0
    %327 = vmatprep.subr.mxu0 0.0
    %328 = vmatpush1.msra.mxu0 0.0
    %329 = vmatprep.subr.mxu0 0.0
    %330 = vmatpush1.msra.mxu0 0.0
    %331 = vmatprep.subr.mxu0 0.0
    %332 = vmatpush1.msra.mxu0 0.0
    %333 = vmatprep.subr.mxu0 0.0
    %334 = vmatpush1.msra.mxu0 0.0
    %335 = vmatprep.subr.mxu0 0.0
    %336 = vmatpush1.msra.mxu0 0.0
    %337 = vmatprep.subr.mxu0 0.0
    %338 = vmatpush1.msra.mxu0 %v292
    %339 = vmatprep.subr.mxu0 0.0
    %340 = vmatpush1.msra.mxu0 %v291
    %341 = vmatprep.subr.mxu0 0.0
    %342 = vmatpush1.msra.mxu0 %v290
    %343 = vmatprep.subr.mxu0 0.0
    %344 = vmatpush1.msra.mxu0 %v289
    %345 = vmatprep.subr.mxu0 0.0
    %346 = vmatpush2.msra.mxu0 0.0
    %347 = vmatprep.subr.mxu0 0.0
    %348 = vmatpush2.msra.mxu0 0.0
    %349 = vmatprep.subr.mxu0 0.0
    %350 = vmatpush2.msra.mxu0 0.0
    %351 = vmatprep.subr.mxu0 0.0
    %352 = vmatpush2.msra.mxu0 0.0
    %353 = vmatprep.subr.mxu0 0.0
    %354 = vmatpush2.msra.mxu0 0.0
    %355 = vmatprep.subr.mxu0 0.0
    %356 = vmatpush2.msra.mxu0 0.0
    %357 = vmatprep.subr.mxu0 0.0
    %358 = vmatpush2.msra.mxu0 0.0
    %359 = vmatprep.subr.mxu0 0.0
    %360 = vmatpush2.msra.mxu0 0.0
    %361 = vmatprep.subr.mxu0 0.0
    %362 = vmatpush2.msra.mxu0 0.0
    %363 = vmatprep.subr.mxu0 0.0
    %364 = vmatpush2.msra.mxu0 0.0
    %365 = vmatprep.subr.mxu0 0.0
    %366 = vmatpush2.msra.mxu0 0.0
    %367 = vmatprep.subr.mxu0 0.0
    %368 = vmatpush2.msra.mxu0 0.0
    %369 = vmatprep.subr.mxu0 0.0
    %370 = vmatpush2.msra.mxu0 0.0
    %371 = vmatprep.subr.mxu0 0.0
    %372 = vmatpush2.msra.mxu0 0.0
    %373 = vmatprep.subr.mxu0 0.0
    %374 = vmatpush2.msra.mxu0 0.0
    %375 = vmatprep.subr.mxu0 0.0
    %376 = vmatpush2.msra.mxu0 0.0
    %377 = vmatprep.mubr.f32.mxu0 0.0
    %378 = vmatmul.mubr.f32.gmra.mxu0 %v308
    %v379 = vpop.f32.mrf.mxu0
    %v380 = vadd.f32 %v300, %v379
    %v381 = vpop.f32.mrf.mxu0
    %382 = vmatprep.mubr.f32.mxu0 0.0
    %383 = vmatmul.mubr.f32.gmra.mxu0 %v311
    %v384 = vpop.f32.mrf.mxu0
    %v385 = vadd.f32 %v305, %v384
    %v386 = vpop.f32.mrf.mxu0
    %387 = vdwg.mxu0
    %388 = vst [vmem:[#allocation2] sm:$0xff] %v380
    %389 = vst [vmem:[#allocation2 + $0x8] sm:$0x1] %v385
    // Predicated region
    $region30: #{tpu_custom_call.1} parent=1 // pred_check
      _
    $region31: #{tpu_custom_call.1} parent=1 // pred_check_branch
      %391 = sbr.rel (0) target = $region33
    $region32: #{tpu_custom_call.1} parent=1 // pred_region
      %s393 = ssub.s32 256, 256
      %394 = vsyncadd [#allocation3], %s393
      %s395 = sshll.u32 [#allocation2], 4
      %s396 = int_to_ptr.vmem [resolvable:$true] %s395
      %401 = dma.vmem_to_hbm [thread:$0]  %s396, 256, %s7, [#allocation3], 128, 128, 8
    $region33: #{tpu_custom_call.1} parent=1 // pred_fallthru
      _
    // Predicated region
    $region34: #{tpu_custom_call.1} parent=1 // pred_check
      _
    $region35: #{tpu_custom_call.1} parent=1 // pred_check_branch
      %403 = sbr.rel (0) target = $region37
    $region36: #{tpu_custom_call.1} parent=1 // pred_region
      %404 = dma.done [#allocation3], 256
    $region37: #{tpu_custom_call.1} parent=1 // pred_fallthru
      _
    %405 = vsyncpa [#allocation3], 1

</llo_original>
